<compile_context>
chip_gen: v7x
topology: tpu7x:2x2x1
jax: 0.10.0
libtpu: 0.0.40
codegen_flags: <defaults>
</compile_context>

<pallas_src>
import functools

import jax
import jax.numpy as jnp
import numpy as np
from jax import lax
from jax.experimental import pallas as pl
from jax.experimental.pallas import tpu as pltpu

KW = 4                       # kernel_size
PADW = 2                     # int(ceil((4 - 1) / 2))
LRELU_SLOPE = 0.2
BN_EPS = 1e-5

LANE = 128                   # lane width / MXU alignment
TM_MAX = 512                 # output-row tile (MXU-aligned, fits v7x VMEM)
TK_MAX = 1024                # contraction tile (bf16)
VMEM_LIMIT = 48 * 1024 * 1024


def _round_up(x, m):
    return ((x + m - 1) // m) * m


# ----------------------------- Pallas kernels -------------------------------- #
def _gemm_bias_act_kernel(x_ref, w_ref, b_ref, y_ref, acc_ref, *, tk, use_act):
    """Tiled bf16 GEMM + bias (+ LeakyReLU) for layers without BatchNorm.

    The weight ref holds the full (k_pad, c_pad) matrix VMEM-resident; the
    current contraction chunk is sliced inside the kernel."""
    k = pl.program_id(1)

    @pl.when(k == 0)
    def _init():
        acc_ref[...] = jnp.zeros_like(acc_ref)

    off = pl.multiple_of(k * tk, tk)
    acc_ref[...] += jnp.dot(x_ref[...], w_ref[pl.ds(off, tk), :],
                            preferred_element_type=jnp.float32)

    @pl.when(k == pl.num_programs(1) - 1)
    def _finalize():
        y = acc_ref[...] + b_ref[...]
        if use_act:
            y = jnp.where(y >= 0, y, LRELU_SLOPE * y)
        y_ref[...] = y.astype(y_ref.dtype)


def _gemm_stats_kernel(x_ref, w_ref, y_ref, sum_ref, sq_ref, acc_ref, *, tk):
    """Tiled bf16 GEMM emitting the raw conv output plus *per-M-tile* partial
    per-channel sum / sum-of-squares (batch-norm statistics).  Each M tile owns
    its own stats rows -> the M grid axis stays "parallel" (megacore-safe).
    Conv bias is intentionally dropped: BN mean subtraction cancels it exactly."""
    k = pl.program_id(1)

    @pl.when(k == 0)
    def _init():
        acc_ref[...] = jnp.zeros_like(acc_ref)

    off = pl.multiple_of(k * tk, tk)
    acc_ref[...] += jnp.dot(x_ref[...], w_ref[pl.ds(off, tk), :],
                            preferred_element_type=jnp.float32)

    @pl.when(k == pl.num_programs(1) - 1)
    def _finalize():
        y = acc_ref[...]
        y_ref[...] = y.astype(y_ref.dtype)
        # Cross-sublane reductions use the XLU slot -> essentially free next to
        # the MXU-bound GEMM.  Stats are f32 from the f32 accumulator.
        s = jnp.sum(y, axis=0)[None, None, :]          # (1, 1, c_pad)
        sq = jnp.sum(y * y, axis=0)[None, None, :]     # (1, 1, c_pad)
        # Broadcast over 8 sublanes so the stats block is (8,128)-aligned.
        sum_ref[...] = jnp.broadcast_to(s, sum_ref.shape)
        sq_ref[...] = jnp.broadcast_to(sq, sq_ref.shape)


def _bn_act_kernel(y_ref, scale_ref, shift_ref, o_ref):
    """Elementwise y*scale + shift followed by LeakyReLU(0.2); bf16 in/out."""
    o = y_ref[...].astype(jnp.float32) * scale_ref[...] + shift_ref[...]
    o_ref[...] = jnp.where(o >= 0, o, LRELU_SLOPE * o).astype(o_ref.dtype)


# ------------------------------ kernel wrappers ------------------------------ #
def _conv_gemm(cols, w_mat, bias, *, use_bn, use_act, out_dtype):
    """cols (M, K) bf16, w_mat (K, cout) f32, bias (cout,) f32."""
    M, K = cols.shape
    cout = w_mat.shape[1]

    c_pad = _round_up(cout, LANE)
    tm = min(TM_MAX, _round_up(M, 256))
    m_pad = _round_up(M, tm)
    if K <= TK_MAX:
        k_pad = _round_up(K, LANE)
        tk = k_pad
    else:
        k_pad = _round_up(K, TK_MAX)
        tk = TK_MAX

    # Zero-pad (zeros contribute nothing to the GEMM or the BN sums).  cols is
    # already bf16, so there is no extra f32 HBM pass here.
    x = jnp.pad(cols, ((0, m_pad - M), (0, k_pad - K)))
    w = jnp.pad(w_mat, ((0, k_pad - K), (0, c_pad - cout))).astype(jnp.bfloat16)

    grid = (m_pad // tm, k_pad // tk)
    n_mt = grid[0]
    x_spec = pl.BlockSpec((tm, tk), lambda i, k: (i, k))
    # Full weight matrix, grid-invariant -> VMEM-resident, DMA'd once.
    w_spec = pl.BlockSpec((k_pad, c_pad), lambda i, k: (0, 0))
    y_spec = pl.BlockSpec((tm, c_pad), lambda i, k: (i, 0))
    stat_spec = pl.BlockSpec((1, 8, c_pad), lambda i, k: (i, 0, 0))
    vec_spec = pl.BlockSpec((1, c_pad), lambda i, k: (0, 0))

    cost = pl.CostEstimate(
        flops=2 * m_pad * k_pad * c_pad,
        transcendentals=0,
        bytes_accessed=x.size * 2 + w.size * 2
        + m_pad * c_pad * jnp.dtype(out_dtype).itemsize)

    if use_bn:
        y, s, sq = pl.pallas_call(
            functools.partial(_gemm_stats_kernel, tk=tk),
            out_shape=(jax.ShapeDtypeStruct((m_pad, c_pad), out_dtype),
                       jax.ShapeDtypeStruct((n_mt, 8, c_pad), jnp.float32),
                       jax.ShapeDtypeStruct((n_mt, 8, c_pad), jnp.float32)),
            grid_spec=pltpu.PrefetchScalarGridSpec(
                num_scalar_prefetch=0, grid=grid,
                in_specs=[x_spec, w_spec],
                out_specs=[y_spec, stat_spec, stat_spec],
                scratch_shapes=[pltpu.VMEM((tm, c_pad), jnp.float32)]),
            compiler_params=pltpu.CompilerParams(
                dimension_semantics=("parallel", "arbitrary"),
                vmem_limit_bytes=VMEM_LIMIT),
            cost_estimate=cost,
        )(x, w)
        # Tiny cross-tile reduction of the per-tile partial statistics.
        s = jnp.sum(s[:, 0, :], axis=0)
        sq = jnp.sum(sq[:, 0, :], axis=0)
        return y, s, sq, (M, cout, m_pad, c_pad, tm)

    b = jnp.pad(bias, (0, c_pad - cout)).reshape(1, c_pad).astype(jnp.float32)
    y = pl.pallas_call(
        functools.partial(_gemm_bias_act_kernel, tk=tk, use_act=use_act),
        out_shape=jax.ShapeDtypeStruct((m_pad, c_pad), out_dtype),
        grid_spec=pltpu.PrefetchScalarGridSpec(
            num_scalar_prefetch=0, grid=grid,
            in_specs=[x_spec, w_spec, vec_spec],
            out_specs=y_spec,
            scratch_shapes=[pltpu.VMEM((tm, c_pad), jnp.float32)]),
        compiler_params=pltpu.CompilerParams(
            dimension_semantics=("parallel", "arbitrary"),
            vmem_limit_bytes=VMEM_LIMIT),
        cost_estimate=cost,
    )(x, w, b)
    return y, None, None, (M, cout, m_pad, c_pad, tm)


def _bn_act(y, scale, shift, m_pad, c_pad, tm):
    return pl.pallas_call(
        _bn_act_kernel,
        out_shape=jax.ShapeDtypeStruct((m_pad, c_pad), jnp.bfloat16),
        grid_spec=pltpu.PrefetchScalarGridSpec(
            num_scalar_prefetch=0, grid=(m_pad // tm,),
            in_specs=[pl.BlockSpec((tm, c_pad), lambda i: (i, 0)),
                      pl.BlockSpec((1, c_pad), lambda i: (0, 0)),
                      pl.BlockSpec((1, c_pad), lambda i: (0, 0))],
            out_specs=pl.BlockSpec((tm, c_pad), lambda i: (i, 0))),
        compiler_params=pltpu.CompilerParams(
            dimension_semantics=("parallel",),
            vmem_limit_bytes=VMEM_LIMIT),
    )(y, scale, shift)


# ------------------------------- JAX glue ------------------------------------ #
def _im2col(x_nhwc, stride):
    """Extract 4x4 patches (padding=2) as (N*Ho*Wo, 16*C) in bf16. Layout glue."""
    x = jnp.pad(x_nhwc, ((0, 0), (PADW, PADW), (PADW, PADW), (0, 0)))
    N, Hp, Wp, C = x.shape
    Ho = (Hp - KW) // stride + 1
    Wo = (Wp - KW) // stride + 1
    taps = []
    for i in range(KW):
        for j in range(KW):
            taps.append(lax.slice(
                x,
                (0, i, j, 0),
                (N, i + (Ho - 1) * stride + 1, j + (Wo - 1) * stride + 1, C),
                (1, stride, stride, 1)))
    cols = jnp.stack(taps, axis=3)                   # (N, Ho, Wo, KH*KW, C)
    return cols.reshape(N * Ho * Wo, KW * KW * C), (N, Ho, Wo)


def _layer_forward(x_nhwc, p, *, is_last):
    # Cast to bf16 *before* im2col so the 16x-inflated column matrix is only
    # ever materialized in bf16.
    cols, (N, Ho, Wo) = _im2col(x_nhwc.astype(jnp.bfloat16), p["stride"])
    cout, cin = p["w"].shape[0], p["w"].shape[1]
    # OIHW -> (KH, KW, Cin, Cout) -> (KH*KW*Cin, Cout), matching im2col order.
    w_mat = jnp.transpose(p["w"], (2, 3, 1, 0)).reshape(KW * KW * cin, cout)
    out_dtype = jnp.float32 if is_last else jnp.bfloat16

    y, s, sq, (M, cout, m_pad, c_pad, tm) = _conv_gemm(
        cols, w_mat, p["b"], use_bn=p["use_bn"], use_act=p["use_act"],
        out_dtype=out_dtype)

    if p["use_bn"]:
        # Per-channel (c_pad,)-sized statistics math; negligible, done in JAX.
        # Padded rows/channels are all-zero so they do not perturb the sums.
        count = jnp.float32(M)
        mean = s / count
        var = jnp.maximum(sq / count - mean * mean, 0.0)
        inv = lax.rsqrt(var + BN_EPS)
        gamma = jnp.pad(p["gamma"], (0, c_pad - cout))
        beta = jnp.pad(p["beta"], (0, c_pad - cout))
        scale = (gamma * inv).reshape(1, c_pad).astype(jnp.float32)
        shift = (beta - mean * gamma * inv).reshape(1, c_pad).astype(jnp.float32)
        y = _bn_act(y, scale, shift, m_pad, c_pad, tm)

    # TODO(synk): keep the padded (m_pad, c_pad) layout between layers (fused
    # im2col would index only the valid region) to drop this slice/reshape pass.
    return y[:M, :cout].reshape(N, Ho, Wo, cout)


def init_params(key, input_nc, ndf=64, n_layers=3):
    """Deterministic parameter init matching NLayerDiscriminator.__init__ shapes."""
    specs = [(input_nc, ndf, 2, False, True)]        # conv + LeakyReLU
    nf = ndf
    for _ in range(1, n_layers):
        nf_prev, nf = nf, min(nf * 2, 512)
        specs.append((nf_prev, nf, 2, True, True))   # conv + BN + LeakyReLU
    nf_prev, nf = nf, min(nf * 2, 512)
    specs.append((nf_prev, nf, 1, True, True))       # stride-1 conv + BN + LReLU
    specs.append((nf, 1, 1, False, False))           # final 1-channel conv

    params = []
    for (cin, cout, stride, use_bn, use_act) in specs:
        key, kw_, kb_ = jax.random.split(key, 3)
        w = jax.random.normal(kw_, (cout, cin, KW, KW), jnp.float32) * 0.05  # OIHW
        b = jax.random.normal(kb_, (cout,), jnp.float32) * 0.05
        params.append(dict(
            w=w, b=b,
            gamma=jnp.ones((cout,), jnp.float32),    # BatchNorm2d default init
            beta=jnp.zeros((cout,), jnp.float32),
            stride=stride, use_bn=use_bn, use_act=use_act))
    return params


def nlayer_discriminator_forward(x_nchw, params):
    """Forward pass (getIntermFeat=False, use_sigmoid=False). Input/output NCHW."""
    x = jnp.transpose(x_nchw, (0, 2, 3, 1))          # NCHW -> NHWC
    n = len(params)
    for idx, p in enumerate(params):
        x = _layer_forward(x, p, is_last=(idx == n - 1))
    return jnp.transpose(x, (0, 3, 1, 2))            # NHWC -> NCHW


# Pure-JAX reference mirroring the kernel's numerics (bf16 MXU inputs, bf16
# inter-layer activations, f32 accumulation and BN statistics).  Note: for a
# conv immediately followed by train-mode BatchNorm, the conv bias is exactly
# cancelled by the mean subtraction, so both the kernel and this reference
# drop it — the real-arithmetic semantics match the PyTorch module.
def reference_forward(x_nchw, params):
    x = x_nchw.astype(jnp.bfloat16)
    n = len(params)
    y = None
    for idx, p in enumerate(params):
        y = lax.conv_general_dilated(
            x, p["w"].astype(jnp.bfloat16),
            window_strides=(p["stride"],) * 2,
            padding=((PADW, PADW), (PADW, PADW)),
            dimension_numbers=("NCHW", "OIHW", "NCHW"),
            preferred_element_type=jnp.float32)
        if p["use_bn"]:
            mean = jnp.mean(y, axis=(0, 2, 3), keepdims=True)
            var = jnp.mean((y - mean) ** 2, axis=(0, 2, 3), keepdims=True)
            inv = lax.rsqrt(var + BN_EPS)
            scale = p["gamma"][None, :, None, None] * inv
            shift = p["beta"][None, :, None, None] - mean * scale
            # The kernel stores the raw conv output in bf16 before the BN apply.
            y = y.astype(jnp.bfloat16).astype(jnp.float32) * scale + shift
        else:
            y = y + p["b"][None, :, None, None]
        if p["use_act"]:
            y = jnp.where(y >= 0, y, LRELU_SLOPE * y)
        if idx < n - 1:
            x = y.astype(jnp.bfloat16)               # bf16 inter-layer activation
    return y


if __name__ == "__main__":
    key = jax.random.PRNGKey(0)
    kx, kp = jax.random.split(key)

    # Small shapes: batch=2, input_nc=4, spatial=16, ndf=8, n_layers=3.
    x = jax.random.normal(kx, (2, 4, 16, 16), jnp.float32)     # NCHW, like PyTorch
    params = init_params(kp, input_nc=4, ndf=8, n_layers=3)

    out = nlayer_discriminator_forward(x, params)
    out = jax.block_until_ready(out)

    # Shape check: 16 -> 9 -> 5 -> 3 -> 4 -> 5, final channel = 1.
    assert out.shape == (2, 1, 5, 5), out.shape

    ref = reference_forward(x, params)
    np.testing.assert_allclose(np.asarray(out), np.asarray(ref),
                               atol=5e-3, rtol=5e-3)
    print("KERNEL_OK")
</pallas_src>

<mosaic_0001>
module attributes {stable_mosaic.version = 11 : i64} {
  func.func @_gemm_bias_act_kernel(%arg0: i32, %arg1: i32, %arg2: memref<256x128xbf16, #tpu.memory_space<vmem>>, %arg3: memref<128x128xbf16, #tpu.memory_space<vmem>>, %arg4: memref<1x128xf32, #tpu.memory_space<vmem>>, %arg5: memref<256x128xbf16, #tpu.memory_space<vmem>>, %arg6: memref<256x128xf32, #tpu.memory_space<vmem>>) attributes {dimension_semantics = [#tpu.dimension_semantics<parallel>, #tpu.dimension_semantics<arbitrary>], iteration_bounds = array<i64: 1, 1>, scalar_prefetch = 0 : i64, scratch_operands = 1 : i64, tpu.core_type = #tpu.core_type<tc>, window_params = [{transform_indices = @transform_0, window_bounds = array<i64: 256, 128>}, {pipeline_mode = #tpu.pipeline_mode<synchronous>, transform_indices = @transform_1, window_bounds = array<i64: 128, 128>}, {pipeline_mode = #tpu.pipeline_mode<synchronous>, transform_indices = @transform_2, window_bounds = array<i64: 1, 128>}, {transform_indices = @transform_3, window_bounds = array<i64: 256, 128>}]} {
    %c0_i32 = arith.constant 0 : i32
    %0 = arith.cmpi eq, %arg1, %c0_i32 : i32
    %1 = arith.extui %0 : i1 to i32
    %c0_i32_0 = arith.constant 0 : i32
    %2 = arith.cmpi ne, %1, %c0_i32_0 : i32
    scf.if %2 {
      %cst_9 = arith.constant 0.000000e+00 : f32
      %15 = vector.broadcast %cst_9 : f32 to vector<256x128xf32>
      %c0_10 = arith.constant 0 : index
      %c0_11 = arith.constant 0 : index
      %16 = vector.load %arg6[%c0_10, %c0_11] : memref<256x128xf32, #tpu.memory_space<vmem>>, vector<256x128xf32>
      tpu.vector_store %arg6[%c0_10, %c0_11], %15 {strides = array<i32>} : memref<256x128xf32, #tpu.memory_space<vmem>>, vector<256x128xf32>,
    } else {
    }
    %c128_i32 = arith.constant 128 : i32
    %3 = arith.muli %arg1, %c128_i32 : i32
    %4 = tpu.assume_multiple %3, 128 : i32
    %c0 = arith.constant 0 : index
    %c0_1 = arith.constant 0 : index
    %5 = vector.load %arg6[%c0, %c0_1] : memref<256x128xf32, #tpu.memory_space<vmem>>, vector<256x128xf32>
    %c0_2 = arith.constant 0 : index
    %c0_3 = arith.constant 0 : index
    %6 = vector.load %arg2[%c0_2, %c0_3] : memref<256x128xbf16, #tpu.memory_space<vmem>>, vector<256x128xbf16>
    %7 = arith.index_cast %4 : i32 to index
    %c0_4 = arith.constant 0 : index
    %8 = vector.load %arg3[%7, %c0_4] : memref<128x128xbf16, #tpu.memory_space<vmem>>, vector<128x128xbf16>
    %cst = arith.constant dense<0.000000e+00> : vector<256x128xf32>
    %9 = tpu.matmul %6, %8, %cst {dimension_numbers = #tpu.dot_dimension_numbers<[1], [0], [0], [1], [0, 0, 1, 1], [], []>} : vector<256x128xbf16>, vector<128x128xbf16>, vector<256x128xf32> -> vector<256x128xf32>
    %10 = arith.addf %5, %9 : vector<256x128xf32>
    %c0_5 = arith.constant 0 : index
    %c0_6 = arith.constant 0 : index
    %11 = vector.load %arg6[%c0_5, %c0_6] : memref<256x128xf32, #tpu.memory_space<vmem>>, vector<256x128xf32>
    tpu.vector_store %arg6[%c0_5, %c0_6], %10 {strides = array<i32>} : memref<256x128xf32, #tpu.memory_space<vmem>>, vector<256x128xf32>,
    %c0_i32_7 = arith.constant 0 : i32
    %12 = arith.cmpi eq, %arg1, %c0_i32_7 : i32
    %13 = arith.extui %12 : i1 to i32
    %c0_i32_8 = arith.constant 0 : i32
    %14 = arith.cmpi ne, %13, %c0_i32_8 : i32
    scf.if %14 {
      %c0_9 = arith.constant 0 : index
      %c0_10 = arith.constant 0 : index
      %15 = vector.load %arg6[%c0_9, %c0_10] : memref<256x128xf32, #tpu.memory_space<vmem>>, vector<256x128xf32>
      %c0_11 = arith.constant 0 : index
      %c0_12 = arith.constant 0 : index
      %16 = vector.load %arg4[%c0_11, %c0_12] : memref<1x128xf32, #tpu.memory_space<vmem>>, vector<1x128xf32>
      %17 = vector.broadcast %16 : vector<1x128xf32> to vector<256x128xf32>
      %18 = arith.addf %15, %17 : vector<256x128xf32>
      %cst_13 = arith.constant 0.000000e+00 : f32
      %19 = vector.broadcast %cst_13 : f32 to vector<256x128xf32>
      %20 = arith.cmpf oge, %18, %19 : vector<256x128xf32>
      %cst_14 = arith.constant 2.000000e-01 : f32
      %21 = vector.broadcast %cst_14 : f32 to vector<256x128xf32>
      %22 = arith.mulf %21, %18 : vector<256x128xf32>
      %23 = arith.select %20, %18, %22 : vector<256x128xi1>, vector<256x128xf32>
      %24 = arith.truncf %23 : vector<256x128xf32> to vector<256x128xbf16>
      %c0_15 = arith.constant 0 : index
      %c0_16 = arith.constant 0 : index
      %25 = vector.load %arg5[%c0_15, %c0_16] : memref<256x128xbf16, #tpu.memory_space<vmem>>, vector<256x128xbf16>
      tpu.vector_store %arg5[%c0_15, %c0_16], %24 {strides = array<i32>} : memref<256x128xbf16, #tpu.memory_space<vmem>>, vector<256x128xbf16>,
    } else {
    }
    return
  }
  func.func @transform_0(%arg0: i32, %arg1: i32) -> (i32, i32) {
    %c0_i32 = arith.constant 0 : i32
    return %arg0, %arg1 : i32, i32
  }
  func.func @transform_1(%arg0: i32, %arg1: i32) -> (i32, i32) {
    %c0_i32 = arith.constant 0 : i32
    %c0_i32_0 = arith.constant 0 : i32
    %c0_i32_1 = arith.constant 0 : i32
    return %c0_i32, %c0_i32_0 : i32, i32
  }
  func.func @transform_2(%arg0: i32, %arg1: i32) -> (i32, i32) {
    %c0_i32 = arith.constant 0 : i32
    %c0_i32_0 = arith.constant 0 : i32
    %c0_i32_1 = arith.constant 0 : i32
    return %c0_i32, %c0_i32_0 : i32, i32
  }
  func.func @transform_3(%arg0: i32, %arg1: i32) -> (i32, i32) {
    %c0_i32 = arith.constant 0 : i32
    %c0_i32_0 = arith.constant 0 : i32
    return %arg0, %c0_i32 : i32, i32
  }
}

</mosaic_0001>

<llo_original>
// kernel: tpu_custom_call.1
$region0: #{tpu_custom_call.1}
  #allocation0 [shape = 'u32[]', space=smem, size = 0x4, offset = 0x4, fixed_abs, tag = 'smem constant byte address 0x4 - core index']
  #allocation1 [shape = 'u32[144,128]{1,0:T(1,128)}', space=vmem, size = 0x12000, scoped, tag = 'internal scratch']
  #allocation2 [shape = 'f32[256,128]{1,0:T(8,128)}', space=vmem, size = 0x20000, scoped, tag = 'scratch operand']
  %s0 = inlined_call_operand.hbm [shape: bf16[256,128], index: 0, kind: input, shape index: {}]
  %s1 = inlined_call_operand.hbm [shape: bf16[128,128], index: 1, kind: input, shape index: {}]
  %s2 = inlined_call_operand.vmem [shape: f32[1,128], index: 2, kind: input, shape index: {}]
  %s3 = inlined_call_operand.hbm [shape: bf16[256,128], index: 3, kind: output, shape index: {}]
  %s4 = sld [smem:[#allocation0]]
  $region38: #{tpu_custom_call.1} parent=0
    _
  %s6 = ssub.s32 1, %s4
  %s7 = scalar_select 0, %s6, %s4
  $region1: #{tpu_custom_call.1} parent=0
    #allocation3 [shape = 'u8[65536]{0}', space=vmem, size = 0x10000, scoped, tag = 'input window, operand 0, single buffered']
    #allocation4 [shape = 's32[1]{0}', space=sflag, size = 0x4, scoped, tag = 'scoped memory for tpu_custom_call.1']
    #allocation5 [shape = 's32[1]{0}', space=sflag, size = 0x4, scoped, tag = 'scoped memory for tpu_custom_call.1']
    #allocation6 [shape = 'u8[32768]{0}', space=vmem, size = 0x8000, scoped, tag = 'input window, operand 1, single buffered']
    #allocation7 [shape = 's32[1]{0}', space=sflag, size = 0x4, scoped, tag = 'scoped memory for tpu_custom_call.1']
    #allocation8 [shape = 'u8[65536]{0}', space=vmem, size = 0x10000, scoped, tag = 'output window, operand 0, single buffered']
    %8 = vsyncpa [#allocation4], 0
    %9 = vsyncpa [#allocation7], 0
    %10 = vsyncpa [#allocation5], 0
    // Predicated region
    $region2: #{tpu_custom_call.1} parent=1 // pred_check
      _
    $region3: #{tpu_custom_call.1} parent=1 // pred_check_branch
      %12 = sbr.rel (0) target = $region5
    $region4: #{tpu_custom_call.1} parent=1 // pred_region
      %s14 = ssub.s32 2048, 2048
      %15 = vsyncadd [#allocation4], %s14
      %s16 = sshll.u32 [#allocation3], 4
      %s17 = int_to_ptr.vmem [resolvable:$true] %s16
      %22 = dma.hbm_to_vmem [thread:$0]  %s0, 2048, %s17, [#allocation4], 64, 64, 4
    $region5: #{tpu_custom_call.1} parent=1 // pred_fallthru
      _
    // Predicated region
    $region6: #{tpu_custom_call.1} parent=1 // pred_check
      _
    $region7: #{tpu_custom_call.1} parent=1 // pred_check_branch
      %24 = sbr.rel (0) target = $region9
    $region8: #{tpu_custom_call.1} parent=1 // pred_region
      %s26 = ssub.s32 1024, 1024
      %27 = vsyncadd [#allocation7], %s26
      %s28 = sshll.u32 [#allocation6], 4
      %s29 = int_to_ptr.vmem [resolvable:$true] %s28
      %34 = dma.hbm_to_vmem [thread:$0]  %s1, 1024, %s29, [#allocation7], 64, 64, 4
    $region9: #{tpu_custom_call.1} parent=1 // pred_fallthru
      _
    // Predicated region
    $region10: #{tpu_custom_call.1} parent=1 // pred_check
      _
    $region11: #{tpu_custom_call.1} parent=1 // pred_check_branch
      %36 = sbr.rel (0) target = $region13
    $region12: #{tpu_custom_call.1} parent=1 // pred_region
      _
    $region13: #{tpu_custom_call.1} parent=1 // pred_fallthru
      _
    // Predicated region
    $region14: #{tpu_custom_call.1} parent=1 // pred_check
      _
    $region15: #{tpu_custom_call.1} parent=1 // pred_check_branch
      %38 = sbr.rel (0) target = $region17
    $region16: #{tpu_custom_call.1} parent=1 // pred_region
      %39 = dma.done [#allocation4], 2048
    $region17: #{tpu_custom_call.1} parent=1 // pred_fallthru
      _
    // Predicated region
    $region18: #{tpu_custom_call.1} parent=1 // pred_check
      _
    $region19: #{tpu_custom_call.1} parent=1 // pred_check_branch
      %41 = sbr.rel (0) target = $region21
    $region20: #{tpu_custom_call.1} parent=1 // pred_region
      %42 = dma.done [#allocation7], 1024
    $region21: #{tpu_custom_call.1} parent=1 // pred_fallthru
      _
    %p44 = scmp.eq.s32.totalorder 0, 0
    // Predicated region
    $region22: #{tpu_custom_call.1} parent=1 // pred_check
      %p45 = pneg %p44
    $region23: #{tpu_custom_call.1} parent=1 // pred_check_branch
      %47 = sbr.rel (%p45) target = $region25
    $region24: #{tpu_custom_call.1} parent=1 // pred_region
      %48 = vst [vmem:[#allocation2] sm:$0xff] 0.0
      %49 = vst [vmem:[#allocation2 + $0x8] sm:$0xff] 0.0
      %50 = vst [vmem:[#allocation2 + $0x10] sm:$0xff] 0.0
      %51 = vst [vmem:[#allocation2 + $0x18] sm:$0xff] 0.0
      %52 = vst [vmem:[#allocation2 + $0x20] sm:$0xff] 0.0
      %53 = vst [vmem:[#allocation2 + $0x28] sm:$0xff] 0.0
      %54 = vst [vmem:[#allocation2 + $0x30] sm:$0xff] 0.0
      %55 = vst [vmem:[#allocation2 + $0x38] sm:$0xff] 0.0
      %56 = vst [vmem:[#allocation2 + $0x40] sm:$0xff] 0.0
      %57 = vst [vmem:[#allocation2 + $0x48] sm:$0xff] 0.0
      %58 = vst [vmem:[#allocation2 + $0x50] sm:$0xff] 0.0
      %59 = vst [vmem:[#allocation2 + $0x58] sm:$0xff] 0.0
      %60 = vst [vmem:[#allocation2 + $0x60] sm:$0xff] 0.0
      %61 = vst [vmem:[#allocation2 + $0x68] sm:$0xff] 0.0
      %62 = vst [vmem:[#allocation2 + $0x70] sm:$0xff] 0.0
      %63 = vst [vmem:[#allocation2 + $0x78] sm:$0xff] 0.0
      %64 = vst [vmem:[#allocation2 + $0x80] sm:$0xff] 0.0
      %65 = vst [vmem:[#allocation2 + $0x88] sm:$0xff] 0.0
      %66 = vst [vmem:[#allocation2 + $0x90] sm:$0xff] 0.0
      %67 = vst [vmem:[#allocation2 + $0x98] sm:$0xff] 0.0
      %68 = vst [vmem:[#allocation2 + $0xa0] sm:$0xff] 0.0
      %69 = vst [vmem:[#allocation2 + $0xa8] sm:$0xff] 0.0
      %70 = vst [vmem:[#allocation2 + $0xb0] sm:$0xff] 0.0
      %71 = vst [vmem:[#allocation2 + $0xb8] sm:$0xff] 0.0
      %72 = vst [vmem:[#allocation2 + $0xc0] sm:$0xff] 0.0
      %73 = vst [vmem:[#allocation2 + $0xc8] sm:$0xff] 0.0
      %74 = vst [vmem:[#allocation2 + $0xd0] sm:$0xff] 0.0
      %75 = vst [vmem:[#allocation2 + $0xd8] sm:$0xff] 0.0
      %76 = vst [vmem:[#allocation2 + $0xe0] sm:$0xff] 0.0
      %77 = vst [vmem:[#allocation2 + $0xe8] sm:$0xff] 0.0
      %78 = vst [vmem:[#allocation2 + $0xf0] sm:$0xff] 0.0
      %79 = vst [vmem:[#allocation2 + $0xf8] sm:$0xff] 0.0
    $region25: #{tpu_custom_call.1} parent=1 // pred_fallthru
      _
    %s80 = smul.u32 0, 128
    %v81 = vld [vmem:[#allocation2] sm:$0xff]
    %v82 = vld [vmem:[#allocation2 + $0x8] sm:$0xff]
    %v83 = vld [vmem:[#allocation2 + $0x10] sm:$0xff]
    %v84 = vld [vmem:[#allocation2 + $0x18] sm:$0xff]
    %v85 = vld [vmem:[#allocation2 + $0x20] sm:$0xff]
    %v86 = vld [vmem:[#allocation2 + $0x28] sm:$0xff]
    %v87 = vld [vmem:[#allocation2 + $0x30] sm:$0xff]
    %v88 = vld [vmem:[#allocation2 + $0x38] sm:$0xff]
    %v89 = vld [vmem:[#allocation2 + $0x40] sm:$0xff]
    %v90 = vld [vmem:[#allocation2 + $0x48] sm:$0xff]
    %v91 = vld [vmem:[#allocation2 + $0x50] sm:$0xff]
    %v92 = vld [vmem:[#allocation2 + $0x58] sm:$0xff]
    %v93 = vld [vmem:[#allocation2 + $0x60] sm:$0xff]
    %v94 = vld [vmem:[#allocation2 + $0x68] sm:$0xff]
    %v95 = vld [vmem:[#allocation2 + $0x70] sm:$0xff]
    %v96 = vld [vmem:[#allocation2 + $0x78] sm:$0xff]
    %v97 = vld [vmem:[#allocation2 + $0x80] sm:$0xff]
    %v98 = vld [vmem:[#allocation2 + $0x88] sm:$0xff]
    %v99 = vld [vmem:[#allocation2 + $0x90] sm:$0xff]
    %v100 = vld [vmem:[#allocation2 + $0x98] sm:$0xff]
    %v101 = vld [vmem:[#allocation2 + $0xa0] sm:$0xff]
    %v102 = vld [vmem:[#allocation2 + $0xa8] sm:$0xff]
    %v103 = vld [vmem:[#allocation2 + $0xb0] sm:$0xff]
    %v104 = vld [vmem:[#allocation2 + $0xb8] sm:$0xff]
    %v105 = vld [vmem:[#allocation2 + $0xc0] sm:$0xff]
    %v106 = vld [vmem:[#allocation2 + $0xc8] sm:$0xff]
    %v107 = vld [vmem:[#allocation2 + $0xd0] sm:$0xff]
    %v108 = vld [vmem:[#allocation2 + $0xd8] sm:$0xff]
    %v109 = vld [vmem:[#allocation2 + $0xe0] sm:$0xff]
    %v110 = vld [vmem:[#allocation2 + $0xe8] sm:$0xff]
    %v111 = vld [vmem:[#allocation2 + $0xf0] sm:$0xff]
    %v112 = vld [vmem:[#allocation2 + $0xf8] sm:$0xff]
    %v113 = vld [vmem:[#allocation3] sm:$0xf]
    %v114 = vld [vmem:[#allocation3 + $0x4] sm:$0xf]
    %v115 = vld [vmem:[#allocation3 + $0x8] sm:$0xf]
    %v116 = vld [vmem:[#allocation3 + $0xc] sm:$0xf]
    %v117 = vld [vmem:[#allocation3 + $0x10] sm:$0xf]
    %v118 = vld [vmem:[#allocation3 + $0x14] sm:$0xf]
    %v119 = vld [vmem:[#allocation3 + $0x18] sm:$0xf]
    %v120 = vld [vmem:[#allocation3 + $0x1c] sm:$0xf]
    %v121 = vld [vmem:[#allocation3 + $0x20] sm:$0xf]
    %v122 = vld [vmem:[#allocation3 + $0x24] sm:$0xf]
    %v123 = vld [vmem:[#allocation3 + $0x28] sm:$0xf]
    %v124 = vld [vmem:[#allocation3 + $0x2c] sm:$0xf]
    %v125 = vld [vmem:[#allocation3 + $0x30] sm:$0xf]
    %v126 = vld [vmem:[#allocation3 + $0x34] sm:$0xf]
    %v127 = vld [vmem:[#allocation3 + $0x38] sm:$0xf]
    %v128 = vld [vmem:[#allocation3 + $0x3c] sm:$0xf]
    %v129 = vld [vmem:[#allocation3 + $0x40] sm:$0xf]
    %v130 = vld [vmem:[#allocation3 + $0x44] sm:$0xf]
    %v131 = vld [vmem:[#allocation3 + $0x48] sm:$0xf]
    %v132 = vld [vmem:[#allocation3 + $0x4c] sm:$0xf]
    %v133 = vld [vmem:[#allocation3 + $0x50] sm:$0xf]
    %v134 = vld [vmem:[#allocation3 + $0x54] sm:$0xf]
    %v135 = vld [vmem:[#allocation3 + $0x58] sm:$0xf]
    %v136 = vld [vmem:[#allocation3 + $0x5c] sm:$0xf]
    %v137 = vld [vmem:[#allocation3 + $0x60] sm:$0xf]
    %v138 = vld [vmem:[#allocation3 + $0x64] sm:$0xf]
    %v139 = vld [vmem:[#allocation3 + $0x68] sm:$0xf]
    %v140 = vld [vmem:[#allocation3 + $0x6c] sm:$0xf]
    %v141 = vld [vmem:[#allocation3 + $0x70] sm:$0xf]
    %v142 = vld [vmem:[#allocation3 + $0x74] sm:$0xf]
    %v143 = vld [vmem:[#allocation3 + $0x78] sm:$0xf]
    %v144 = vld [vmem:[#allocation3 + $0x7c] sm:$0xf]
    %s145 = sshra.s32 %s80, 3
    %s146 = sand.u32 %s80, 7
    %s147 = smul.addr %s145, 4
    %s148 = scalar_lea.vmem [#allocation6], %s147
    %v149 = vld [vmem:[%s148] sm:$0xf]
    %v150 = vld [vmem:[%s148 + $0x4] sm:$0xf]
    %v151 = vld [vmem:[%s148 + $0x8] sm:$0xf]
    %v152 = vld [vmem:[%s148 + $0xc] sm:$0xf]
    %v153 = vld [vmem:[%s148 + $0x10] sm:$0xf]
    %v154 = vld [vmem:[%s148 + $0x14] sm:$0xf]
    %v155 = vld [vmem:[%s148 + $0x18] sm:$0xf]
    %v156 = vld [vmem:[%s148 + $0x1c] sm:$0xf]
    %v157 = vld [vmem:[%s148 + $0x20] sm:$0xf]
    %v158 = vld [vmem:[%s148 + $0x24] sm:$0xf]
    %v159 = vld [vmem:[%s148 + $0x28] sm:$0xf]
    %v160 = vld [vmem:[%s148 + $0x2c] sm:$0xf]
    %v161 = vld [vmem:[%s148 + $0x30] sm:$0xf]
    %v162 = vld [vmem:[%s148 + $0x34] sm:$0xf]
    %v163 = vld [vmem:[%s148 + $0x38] sm:$0xf]
    %v164 = vld [vmem:[%s148 + $0x3c] sm:$0xf]
    %v197 = vunpack.c.l.b16 %v113
    %v198 = vunpack.c.l.b16 %v114
    %v199 = vunpack.c.l.b16 %v115
    %v200 = vunpack.c.l.b16 %v116
    %v201 = vunpack.c.l.b16 %v117
    %v202 = vunpack.c.l.b16 %v118
    %v203 = vunpack.c.l.b16 %v119
    %v204 = vunpack.c.l.b16 %v120
    %v205 = vunpack.c.l.b16 %v121
    %v206 = vunpack.c.l.b16 %v122
    %v207 = vunpack.c.l.b16 %v123
    %v208 = vunpack.c.l.b16 %v124
    %v209 = vunpack.c.l.b16 %v125
    %v210 = vunpack.c.l.b16 %v126
    %v211 = vunpack.c.l.b16 %v127
    %v212 = vunpack.c.l.b16 %v128
    %v213 = vunpack.c.l.b16 %v129
    %v214 = vunpack.c.l.b16 %v130
    %v215 = vunpack.c.l.b16 %v131
    %v216 = vunpack.c.l.b16 %v132
    %v217 = vunpack.c.l.b16 %v133
    %v218 = vunpack.c.l.b16 %v134
    %v219 = vunpack.c.l.b16 %v135
    %v220 = vunpack.c.l.b16 %v136
    %v221 = vunpack.c.l.b16 %v137
    %v222 = vunpack.c.l.b16 %v138
    %v223 = vunpack.c.l.b16 %v139
    %v224 = vunpack.c.l.b16 %v140
    %v225 = vunpack.c.l.b16 %v141
    %v226 = vunpack.c.l.b16 %v142
    %v227 = vunpack.c.l.b16 %v143
    %v228 = vunpack.c.l.b16 %v144
    %v229 = vpack.c.b16 %v198, %v197
    %v230 = vpack.c.b16 %v200, %v199
    %v231 = vpack.c.b16 %v202, %v201
    %v232 = vpack.c.b16 %v204, %v203
    %v233 = vpack.c.b16 %v206, %v205
    %v234 = vpack.c.b16 %v208, %v207
    %v235 = vpack.c.b16 %v210, %v209
    %v236 = vpack.c.b16 %v212, %v211
    %v237 = vpack.c.b16 %v214, %v213
    %v238 = vpack.c.b16 %v216, %v215
    %v239 = vpack.c.b16 %v218, %v217
    %v240 = vpack.c.b16 %v220, %v219
    %v241 = vpack.c.b16 %v222, %v221
    %v242 = vpack.c.b16 %v224, %v223
    %v243 = vpack.c.b16 %v226, %v225
    %v244 = vpack.c.b16 %v228, %v227
    %v277 = vunpack.c.l.b16 %v149
    %v278 = vunpack.c.l.b16 %v150
    %v279 = vunpack.c.l.b16 %v151
    %v280 = vunpack.c.l.b16 %v152
    %v281 = vunpack.c.l.b16 %v153
    %v282 = vunpack.c.l.b16 %v154
    %v283 = vunpack.c.l.b16 %v155
    %v284 = vunpack.c.l.b16 %v156
    %v285 = vunpack.c.l.b16 %v157
    %v286 = vunpack.c.l.b16 %v158
    %v287 = vunpack.c.l.b16 %v159
    %v288 = vunpack.c.l.b16 %v160
    %v289 = vunpack.c.l.b16 %v161
    %v290 = vunpack.c.l.b16 %v162
    %v291 = vunpack.c.l.b16 %v163
    %v292 = vunpack.c.l.b16 %v164
    %v293 = vpack.c.b16 %v278, %v277
    %v294 = vpack.c.b16 %v280, %v279
    %v295 = vpack.c.b16 %v282, %v281
    %v296 = vpack.c.b16 %v284, %v283
    %v297 = vpack.c.b16 %v286, %v285
    %v298 = vpack.c.b16 %v288, %v287
    %v299 = vpack.c.b16 %v290, %v289
    %v300 = vpack.c.b16 %v292, %v291
    %309 = vmatprep.subr.bf16.mxu0 0
    %310 = vmatpush1.bf16.msra.mxu0 %v293
    %311 = vmatprep.subr.bf16.mxu0 0
    %312 = vmatpush1.bf16.msra.mxu0 %v294
    %313 = vmatprep.subr.bf16.mxu0 0
    %314 = vmatpush1.bf16.msra.mxu0 %v295
    %315 = vmatprep.subr.bf16.mxu0 0
    %316 = vmatpush1.bf16.msra.mxu0 %v296
    %317 = vmatprep.subr.bf16.mxu0 0
    %318 = vmatpush1.bf16.msra.mxu0 %v297
    %319 = vmatprep.subr.bf16.mxu0 0
    %320 = vmatpush1.bf16.msra.mxu0 %v298
    %321 = vmatprep.subr.bf16.mxu0 0
    %322 = vmatpush1.bf16.msra.mxu0 %v299
    %323 = vmatprep.subr.bf16.mxu0 0
    %324 = vmatpush1.bf16.msra.mxu0 %v300
    %325 = vmatprep.subr.bf16.mxu0 0
    %326 = vmatpush1.bf16.msra.mxu0 0
    %327 = vmatprep.subr.bf16.mxu0 0
    %328 = vmatpush1.bf16.msra.mxu0 0
    %329 = vmatprep.subr.bf16.mxu0 0
    %330 = vmatpush1.bf16.msra.mxu0 0
    %331 = vmatprep.subr.bf16.mxu0 0
    %332 = vmatpush1.bf16.msra.mxu0 0
    %333 = vmatprep.subr.bf16.mxu0 0
    %334 = vmatpush1.bf16.msra.mxu0 0
    %335 = vmatprep.subr.bf16.mxu0 0
    %336 = vmatpush1.bf16.msra.mxu0 0
    %337 = vmatprep.subr.bf16.mxu0 0
    %338 = vmatpush1.bf16.msra.mxu0 0
    %339 = vmatprep.subr.bf16.mxu0 0
    %340 = vmatpush1.bf16.msra.mxu0 0
    %341 = vmatprep.mubr.bf16.mxu0 0
    %342 = vmatmul.mubr.bf16.gmra.mrb[0].mxu0 %v229
    %v343 = vpop.f32.mrb[0].mxu0
    %v344 = vadd.f32 0.0, %v343
    %v345 = vpop.f32.mrb[0].mxu0
    %v346 = vpop.f32.mrb[0].mxu0
    %v347 = vadd.f32 0.0, %v346
    %v348 = vpop.f32.mrb[0].mxu0
    %349 = vmatprep.mubr.bf16.mxu0 0
    %350 = vmatmul.mubr.bf16.gmra.mrb[0].mxu0 %v230
    %v351 = vpop.f32.mrb[0].mxu0
    %v352 = vadd.f32 0.0, %v351
    %v353 = vpop.f32.mrb[0].mxu0
    %v354 = vpop.f32.mrb[0].mxu0
    %v355 = vadd.f32 0.0, %v354
    %v356 = vpop.f32.mrb[0].mxu0
    %357 = vmatprep.mubr.bf16.mxu0 0
    %358 = vmatmul.mubr.bf16.gmra.mrb[0].mxu0 %v231
    %v359 = vpop.f32.mrb[0].mxu0
    %v360 = vadd.f32 0.0, %v359
    %v361 = vpop.f32.mrb[0].mxu0
    %v362 = vpop.f32.mrb[0].mxu0
    %v363 = vadd.f32 0.0, %v362
    %v364 = vpop.f32.mrb[0].mxu0
    %365 = vmatprep.mubr.bf16.mxu0 0
    %366 = vmatmul.mubr.bf16.gmra.mrb[0].mxu0 %v232
    %v367 = vpop.f32.mrb[0].mxu0
    %v368 = vadd.f32 0.0, %v367
    %v369 = vpop.f32.mrb[0].mxu0
    %v370 = vpop.f32.mrb[0].mxu0
    %v371 = vadd.f32 0.0, %v370
    %v372 = vpop.f32.mrb[0].mxu0
    %373 = vmatprep.mubr.bf16.mxu0 0
    %374 = vmatmul.mubr.bf16.gmra.mrb[0].mxu0 %v233
    %v375 = vpop.f32.mrb[0].mxu0
    %v376 = vadd.f32 0.0, %v375
    %v377 = vpop.f32.mrb[0].mxu0
    %v378 = vpop.f32.mrb[0].mxu0
    %v379 = vadd.f32 0.0, %v378
    %v380 = vpop.f32.mrb[0].mxu0
    %381 = vmatprep.mubr.bf16.mxu0 0
    %382 = vmatmul.mubr.bf16.gmra.mrb[0].mxu0 %v234
    %v383 = vpop.f32.mrb[0].mxu0
    %v384 = vadd.f32 0.0, %v383
    %v385 = vpop.f32.mrb[0].mxu0
    %v386 = vpop.f32.mrb[0].mxu0
    %v387 = vadd.f32 0.0, %v386
    %v388 = vpop.f32.mrb[0].mxu0
    %389 = vmatprep.mubr.bf16.mxu0 0
    %390 = vmatmul.mubr.bf16.gmra.mrb[0].mxu0 %v235
    %v391 = vpop.f32.mrb[0].mxu0
    %v392 = vadd.f32 0.0, %v391
    %v393 = vpop.f32.mrb[0].mxu0
    %v394 = vpop.f32.mrb[0].mxu0
    %v395 = vadd.f32 0.0, %v394
    %v396 = vpop.f32.mrb[0].mxu0
    %397 = vmatprep.mubr.bf16.mxu0 0
    %398 = vmatmul.mubr.bf16.gmra.mrb[0].mxu0 %v236
    %v399 = vpop.f32.mrb[0].mxu0
    %v400 = vadd.f32 0.0, %v399
    %v401 = vpop.f32.mrb[0].mxu0
    %v402 = vpop.f32.mrb[0].mxu0
    %v403 = vadd.f32 0.0, %v402
    %v404 = vpop.f32.mrb[0].mxu0
    %405 = vmatprep.mubr.bf16.mxu0 0
    %406 = vmatmul.mubr.bf16.gmra.mrb[0].mxu0 %v237
    %v407 = vpop.f32.mrb[0].mxu0
    %v408 = vadd.f32 0.0, %v407
    %v409 = vpop.f32.mrb[0].mxu0
    %v410 = vpop.f32.mrb[0].mxu0
    %v411 = vadd.f32 0.0, %v410
    %v412 = vpop.f32.mrb[0].mxu0
    %413 = vmatprep.mubr.bf16.mxu0 0
    %414 = vmatmul.mubr.bf16.gmra.mrb[0].mxu0 %v238
    %v415 = vpop.f32.mrb[0].mxu0
    %v416 = vadd.f32 0.0, %v415
    %v417 = vpop.f32.mrb[0].mxu0
    %v418 = vpop.f32.mrb[0].mxu0
    %v419 = vadd.f32 0.0, %v418
    %v420 = vpop.f32.mrb[0].mxu0
    %421 = vmatprep.mubr.bf16.mxu0 0
    %422 = vmatmul.mubr.bf16.gmra.mrb[0].mxu0 %v239
    %v423 = vpop.f32.mrb[0].mxu0
    %v424 = vadd.f32 0.0, %v423
    %v425 = vpop.f32.mrb[0].mxu0
    %v426 = vpop.f32.mrb[0].mxu0
    %v427 = vadd.f32 0.0, %v426
    %v428 = vpop.f32.mrb[0].mxu0
    %429 = vmatprep.mubr.bf16.mxu0 0
    %430 = vmatmul.mubr.bf16.gmra.mrb[0].mxu0 %v240
    %v431 = vpop.f32.mrb[0].mxu0
    %v432 = vadd.f32 0.0, %v431
    %v433 = vpop.f32.mrb[0].mxu0
    %v434 = vpop.f32.mrb[0].mxu0
    %v435 = vadd.f32 0.0, %v434
    %v436 = vpop.f32.mrb[0].mxu0
    %437 = vmatprep.mubr.bf16.mxu0 0
    %438 = vmatmul.mubr.bf16.gmra.mrb[0].mxu0 %v241
    %v439 = vpop.f32.mrb[0].mxu0
    %v440 = vadd.f32 0.0, %v439
    %v441 = vpop.f32.mrb[0].mxu0
    %v442 = vpop.f32.mrb[0].mxu0
    %v443 = vadd.f32 0.0, %v442
    %v444 = vpop.f32.mrb[0].mxu0
    %445 = vmatprep.mubr.bf16.mxu0 0
    %446 = vmatmul.mubr.bf16.gmra.mrb[0].mxu0 %v242
    %v447 = vpop.f32.mrb[0].mxu0
    %v448 = vadd.f32 0.0, %v447
    %v449 = vpop.f32.mrb[0].mxu0
    %v450 = vpop.f32.mrb[0].mxu0
    %v451 = vadd.f32 0.0, %v450
    %v452 = vpop.f32.mrb[0].mxu0
    %453 = vmatprep.mubr.bf16.mxu0 0
    %454 = vmatmul.mubr.bf16.gmra.mrb[0].mxu0 %v243
    %v455 = vpop.f32.mrb[0].mxu0
    %v456 = vadd.f32 0.0, %v455
    %v457 = vpop.f32.mrb[0].mxu0
    %v458 = vpop.f32.mrb[0].mxu0
    %v459 = vadd.f32 0.0, %v458
    %v460 = vpop.f32.mrb[0].mxu0
    %461 = vmatprep.mubr.bf16.mxu0 0
    %462 = vmatmul.mubr.bf16.gmra.mrb[0].mxu0 %v244
    %v463 = vpop.f32.mrb[0].mxu0
    %v464 = vadd.f32 0.0, %v463
    %v465 = vpop.f32.mrb[0].mxu0
    %v466 = vpop.f32.mrb[0].mxu0
    %v467 = vadd.f32 0.0, %v466
    %v468 = vpop.f32.mrb[0].mxu0
    %469 = vdwg.mxu0
    %v470 = vadd.f32 %v81, %v344
    %v471 = vadd.f32 %v82, %v347
    %v472 = vadd.f32 %v83, %v352
    %v473 = vadd.f32 %v84, %v355
    %v474 = vadd.f32 %v85, %v360
    %v475 = vadd.f32 %v86, %v363
    %v476 = vadd.f32 %v87, %v368
    %v477 = vadd.f32 %v88, %v371
    %v478 = vadd.f32 %v89, %v376
    %v479 = vadd.f32 %v90, %v379
    %v480 = vadd.f32 %v91, %v384
    %v481 = vadd.f32 %v92, %v387
    %v482 = vadd.f32 %v93, %v392
    %v483 = vadd.f32 %v94, %v395
    %v484 = vadd.f32 %v95, %v400
    %v485 = vadd.f32 %v96, %v403
    %v486 = vadd.f32 %v97, %v408
    %v487 = vadd.f32 %v98, %v411
    %v488 = vadd.f32 %v99, %v416
    %v489 = vadd.f32 %v100, %v419
    %v490 = vadd.f32 %v101, %v424
    %v491 = vadd.f32 %v102, %v427
    %v492 = vadd.f32 %v103, %v432
    %v493 = vadd.f32 %v104, %v435
    %v494 = vadd.f32 %v105, %v440
    %v495 = vadd.f32 %v106, %v443
    %v496 = vadd.f32 %v107, %v448
    %v497 = vadd.f32 %v108, %v451
    %v498 = vadd.f32 %v109, %v456
    %v499 = vadd.f32 %v110, %v459
    %v500 = vadd.f32 %v111, %v464
    %v501 = vadd.f32 %v112, %v467
    %502 = vst [vmem:[#allocation2] sm:$0xff] %v470
    %503 = vst [vmem:[#allocation2 + $0x8] sm:$0xff] %v471
    %504 = vst [vmem:[#allocation2 + $0x10] sm:$0xff] %v472
    %505 = vst [vmem:[#allocation2 + $0x18] sm:$0xff] %v473
    %506 = vst [vmem:[#allocation2 + $0x20] sm:$0xff] %v474
    %507 = vst [vmem:[#allocation2 + $0x28] sm:$0xff] %v475
    %508 = vst [vmem:[#allocation2 + $0x30] sm:$0xff] %v476
    %509 = vst [vmem:[#allocation2 + $0x38] sm:$0xff] %v477
    %510 = vst [vmem:[#allocation2 + $0x40] sm:$0xff] %v478
    %511 = vst [vmem:[#allocation2 + $0x48] sm:$0xff] %v479
    %512 = vst [vmem:[#allocation2 + $0x50] sm:$0xff] %v480
    %513 = vst [vmem:[#allocation2 + $0x58] sm:$0xff] %v481
    %514 = vst [vmem:[#allocation2 + $0x60] sm:$0xff] %v482
    %515 = vst [vmem:[#allocation2 + $0x68] sm:$0xff] %v483
    %516 = vst [vmem:[#allocation2 + $0x70] sm:$0xff] %v484
    %517 = vst [vmem:[#allocation2 + $0x78] sm:$0xff] %v485
    %518 = vst [vmem:[#allocation2 + $0x80] sm:$0xff] %v486
    %519 = vst [vmem:[#allocation2 + $0x88] sm:$0xff] %v487
    %520 = vst [vmem:[#allocation2 + $0x90] sm:$0xff] %v488
    %521 = vst [vmem:[#allocation2 + $0x98] sm:$0xff] %v489
    %522 = vst [vmem:[#allocation2 + $0xa0] sm:$0xff] %v490
    %523 = vst [vmem:[#allocation2 + $0xa8] sm:$0xff] %v491
    %524 = vst [vmem:[#allocation2 + $0xb0] sm:$0xff] %v492
    %525 = vst [vmem:[#allocation2 + $0xb8] sm:$0xff] %v493
    %526 = vst [vmem:[#allocation2 + $0xc0] sm:$0xff] %v494
    %527 = vst [vmem:[#allocation2 + $0xc8] sm:$0xff] %v495
    %528 = vst [vmem:[#allocation2 + $0xd0] sm:$0xff] %v496
    %529 = vst [vmem:[#allocation2 + $0xd8] sm:$0xff] %v497
    %530 = vst [vmem:[#allocation2 + $0xe0] sm:$0xff] %v498
    %531 = vst [vmem:[#allocation2 + $0xe8] sm:$0xff] %v499
    %532 = vst [vmem:[#allocation2 + $0xf0] sm:$0xff] %v500
    %533 = vst [vmem:[#allocation2 + $0xf8] sm:$0xff] %v501
    // Predicated region
    $region26: #{tpu_custom_call.1} parent=1 // pred_check
      %p534 = pneg %p44
    $region27: #{tpu_custom_call.1} parent=1 // pred_check_branch
      %536 = sbr.rel (%p534) target = $region29
    $region28: #{tpu_custom_call.1} parent=1 // pred_region
      %v537 = vld [vmem:[#allocation2] sm:$0xff]
      %v538 = vld [vmem:[#allocation2 + $0x8] sm:$0xff]
      %v539 = vld [vmem:[#allocation2 + $0x10] sm:$0xff]
      %v540 = vld [vmem:[#allocation2 + $0x18] sm:$0xff]
      %v541 = vld [vmem:[#allocation2 + $0x20] sm:$0xff]
      %v542 = vld [vmem:[#allocation2 + $0x28] sm:$0xff]
      %v543 = vld [vmem:[#allocation2 + $0x30] sm:$0xff]
      %v544 = vld [vmem:[#allocation2 + $0x38] sm:$0xff]
      %v545 = vld [vmem:[#allocation2 + $0x40] sm:$0xff]
      %v546 = vld [vmem:[#allocation2 + $0x48] sm:$0xff]
      %v547 = vld [vmem:[#allocation2 + $0x50] sm:$0xff]
      %v548 = vld [vmem:[#allocation2 + $0x58] sm:$0xff]
      %v549 = vld [vmem:[#allocation2 + $0x60] sm:$0xff]
      %v550 = vld [vmem:[#allocation2 + $0x68] sm:$0xff]
      %v551 = vld [vmem:[#allocation2 + $0x70] sm:$0xff]
      %v552 = vld [vmem:[#allocation2 + $0x78] sm:$0xff]
      %v553 = vld [vmem:[#allocation2 + $0x80] sm:$0xff]
      %v554 = vld [vmem:[#allocation2 + $0x88] sm:$0xff]
      %v555 = vld [vmem:[#allocation2 + $0x90] sm:$0xff]
      %v556 = vld [vmem:[#allocation2 + $0x98] sm:$0xff]
      %v557 = vld [vmem:[#allocation2 + $0xa0] sm:$0xff]
      %v558 = vld [vmem:[#allocation2 + $0xa8] sm:$0xff]
      %v559 = vld [vmem:[#allocation2 + $0xb0] sm:$0xff]
      %v560 = vld [vmem:[#allocation2 + $0xb8] sm:$0xff]
      %v561 = vld [vmem:[#allocation2 + $0xc0] sm:$0xff]
      %v562 = vld [vmem:[#allocation2 + $0xc8] sm:$0xff]
      %v563 = vld [vmem:[#allocation2 + $0xd0] sm:$0xff]
      %v564 = vld [vmem:[#allocation2 + $0xd8] sm:$0xff]
      %v565 = vld [vmem:[#allocation2 + $0xe0] sm:$0xff]
      %v566 = vld [vmem:[#allocation2 + $0xe8] sm:$0xff]
      %v567 = vld [vmem:[#allocation2 + $0xf0] sm:$0xff]
      %v568 = vld [vmem:[#allocation2 + $0xf8] sm:$0xff]
      %v569 = vld [vmem:[%s2] sm:$0x1]
      %v571 = vlaneseq
      %v572 = vshrl.u32 %v571, 7
      %v573 = vsub.s32 0, %v572
      %v574 = vrot.slane %v569, %v573
      %v576 = vadd.f32 %v537, %v574
      %v577 = vadd.f32 %v538, %v574
      %v578 = vadd.f32 %v539, %v574
      %v579 = vadd.f32 %v540, %v574
      %v580 = vadd.f32 %v541, %v574
      %v581 = vadd.f32 %v542, %v574
      %v582 = vadd.f32 %v543, %v574
      %v583 = vadd.f32 %v544, %v574
      %v584 = vadd.f32 %v545, %v574
      %v585 = vadd.f32 %v546, %v574
      %v586 = vadd.f32 %v547, %v574
      %v587 = vadd.f32 %v548, %v574
      %v588 = vadd.f32 %v549, %v574
      %v589 = vadd.f32 %v550, %v574
      %v590 = vadd.f32 %v551, %v574
      %v591 = vadd.f32 %v552, %v574
      %v592 = vadd.f32 %v553, %v574
      %v593 = vadd.f32 %v554, %v574
      %v594 = vadd.f32 %v555, %v574
      %v595 = vadd.f32 %v556, %v574
      %v596 = vadd.f32 %v557, %v574
      %v597 = vadd.f32 %v558, %v574
      %v598 = vadd.f32 %v559, %v574
      %v599 = vadd.f32 %v560, %v574
      %v600 = vadd.f32 %v561, %v574
      %v601 = vadd.f32 %v562, %v574
      %v602 = vadd.f32 %v563, %v574
      %v603 = vadd.f32 %v564, %v574
      %v604 = vadd.f32 %v565, %v574
      %v605 = vadd.f32 %v566, %v574
      %v606 = vadd.f32 %v567, %v574
      %v607 = vadd.f32 %v568, %v574
      %vm608 = vcmp.ge.f32.partialorder %v576, 0.0
      %vm609 = vcmp.ge.f32.partialorder %v577, 0.0
      %vm610 = vcmp.ge.f32.partialorder %v578, 0.0
      %vm611 = vcmp.ge.f32.partialorder %v579, 0.0
      %vm612 = vcmp.ge.f32.partialorder %v580, 0.0
      %vm613 = vcmp.ge.f32.partialorder %v581, 0.0
      %vm614 = vcmp.ge.f32.partialorder %v582, 0.0
      %vm615 = vcmp.ge.f32.partialorder %v583, 0.0
      %vm616 = vcmp.ge.f32.partialorder %v584, 0.0
      %vm617 = vcmp.ge.f32.partialorder %v585, 0.0
      %vm618 = vcmp.ge.f32.partialorder %v586, 0.0
      %vm619 = vcmp.ge.f32.partialorder %v587, 0.0
      %vm620 = vcmp.ge.f32.partialorder %v588, 0.0
      %vm621 = vcmp.ge.f32.partialorder %v589, 0.0
      %vm622 = vcmp.ge.f32.partialorder %v590, 0.0
      %vm623 = vcmp.ge.f32.partialorder %v591, 0.0
      %vm624 = vcmp.ge.f32.partialorder %v592, 0.0
      %vm625 = vcmp.ge.f32.partialorder %v593, 0.0
      %vm626 = vcmp.ge.f32.partialorder %v594, 0.0
      %vm627 = vcmp.ge.f32.partialorder %v595, 0.0
      %vm628 = vcmp.ge.f32.partialorder %v596, 0.0
      %vm629 = vcmp.ge.f32.partialorder %v597, 0.0
      %vm630 = vcmp.ge.f32.partialorder %v598, 0.0
      %vm631 = vcmp.ge.f32.partialorder %v599, 0.0
      %vm632 = vcmp.ge.f32.partialorder %v600, 0.0
      %vm633 = vcmp.ge.f32.partialorder %v601, 0.0
      %vm634 = vcmp.ge.f32.partialorder %v602, 0.0
      %vm635 = vcmp.ge.f32.partialorder %v603, 0.0
      %vm636 = vcmp.ge.f32.partialorder %v604, 0.0
      %vm637 = vcmp.ge.f32.partialorder %v605, 0.0
      %vm638 = vcmp.ge.f32.partialorder %v606, 0.0
      %vm639 = vcmp.ge.f32.partialorder %v607, 0.0
      %v640 = vmul.f32 %v576, 0.2
      %v641 = vmul.f32 %v577, 0.2
      %v642 = vmul.f32 %v578, 0.2
      %v643 = vmul.f32 %v579, 0.2
      %v644 = vmul.f32 %v580, 0.2
      %v645 = vmul.f32 %v581, 0.2
      %v646 = vmul.f32 %v582, 0.2
      %v647 = vmul.f32 %v583, 0.2
      %v648 = vmul.f32 %v584, 0.2
      %v649 = vmul.f32 %v585, 0.2
      %v650 = vmul.f32 %v586, 0.2
      %v651 = vmul.f32 %v587, 0.2
      %v652 = vmul.f32 %v588, 0.2
      %v653 = vmul.f32 %v589, 0.2
      %v654 = vmul.f32 %v590, 0.2
      %v655 = vmul.f32 %v591, 0.2
      %v656 = vmul.f32 %v592, 0.2
      %v657 = vmul.f32 %v593, 0.2
      %v658 = vmul.f32 %v594, 0.2
      %v659 = vmul.f32 %v595, 0.2
      %v660 = vmul.f32 %v596, 0.2
      %v661 = vmul.f32 %v597, 0.2
      %v662 = vmul.f32 %v598, 0.2
      %v663 = vmul.f32 %v599, 0.2
      %v664 = vmul.f32 %v600, 0.2
      %v665 = vmul.f32 %v601, 0.2
      %v666 = vmul.f32 %v602, 0.2
      %v667 = vmul.f32 %v603, 0.2
      %v668 = vmul.f32 %v604, 0.2
      %v669 = vmul.f32 %v605, 0.2
      %v670 = vmul.f32 %v606, 0.2
      %v671 = vmul.f32 %v607, 0.2
      %v672 = vsel %vm608, %v576, %v640
      %v673 = vsel %vm609, %v577, %v641
      %v674 = vsel %vm610, %v578, %v642
      %v675 = vsel %vm611, %v579, %v643
      %v676 = vsel %vm612, %v580, %v644
      %v677 = vsel %vm613, %v581, %v645
      %v678 = vsel %vm614, %v582, %v646
      %v679 = vsel %vm615, %v583, %v647
      %v680 = vsel %vm616, %v584, %v648
      %v681 = vsel %vm617, %v585, %v649
      %v682 = vsel %vm618, %v586, %v650
      %v683 = vsel %vm619, %v587, %v651
      %v684 = vsel %vm620, %v588, %v652
      %v685 = vsel %vm621, %v589, %v653
      %v686 = vsel %vm622, %v590, %v654
      %v687 = vsel %vm623, %v591, %v655
      %v688 = vsel %vm624, %v592, %v656
      %v689 = vsel %vm625, %v593, %v657
      %v690 = vsel %vm626, %v594, %v658
      %v691 = vsel %vm627, %v595, %v659
      %v692 = vsel %vm628, %v596, %v660
      %v693 = vsel %vm629, %v597, %v661
      %v694 = vsel %vm630, %v598, %v662
      %v695 = vsel %vm631, %v599, %v663
      %v696 = vsel %vm632, %v600, %v664
      %v697 = vsel %vm633, %v601, %v665
      %v698 = vsel %vm634, %v602, %v666
      %v699 = vsel %vm635, %v603, %v667
      %v700 = vsel %vm636, %v604, %v668
      %v701 = vsel %vm637, %v605, %v669
      %v702 = vsel %vm638, %v606, %v670
      %v703 = vsel %vm639, %v607, %v671
      %v704 = vpack.c.bf16 %v673, %v672
      %v705 = vpack.c.bf16 %v675, %v674
      %v706 = vpack.c.bf16 %v677, %v676
      %v707 = vpack.c.bf16 %v679, %v678
      %v708 = vpack.c.bf16 %v681, %v680
      %v709 = vpack.c.bf16 %v683, %v682
      %v710 = vpack.c.bf16 %v685, %v684
      %v711 = vpack.c.bf16 %v687, %v686
      %v712 = vpack.c.bf16 %v689, %v688
      %v713 = vpack.c.bf16 %v691, %v690
      %v714 = vpack.c.bf16 %v693, %v692
      %v715 = vpack.c.bf16 %v695, %v694
      %v716 = vpack.c.bf16 %v697, %v696
      %v717 = vpack.c.bf16 %v699, %v698
      %v718 = vpack.c.bf16 %v701, %v700
      %v719 = vpack.c.bf16 %v703, %v702
      %v736 = vunpack.c.l.b16 %v704
      %v737 = vunpack.c.h.b16 %v704
      %v738 = vunpack.c.l.b16 %v705
      %v739 = vunpack.c.h.b16 %v705
      %v740 = vunpack.c.l.b16 %v706
      %v741 = vunpack.c.h.b16 %v706
      %v742 = vunpack.c.l.b16 %v707
      %v743 = vunpack.c.h.b16 %v707
      %v744 = vunpack.c.l.b16 %v708
      %v745 = vunpack.c.h.b16 %v708
      %v746 = vunpack.c.l.b16 %v709
      %v747 = vunpack.c.h.b16 %v709
      %v748 = vunpack.c.l.b16 %v710
      %v749 = vunpack.c.h.b16 %v710
      %v750 = vunpack.c.l.b16 %v711
      %v751 = vunpack.c.h.b16 %v711
      %v752 = vunpack.c.l.b16 %v712
      %v753 = vunpack.c.h.b16 %v712
      %v754 = vunpack.c.l.b16 %v713
      %v755 = vunpack.c.h.b16 %v713
      %v756 = vunpack.c.l.b16 %v714
      %v757 = vunpack.c.h.b16 %v714
      %v758 = vunpack.c.l.b16 %v715
      %v759 = vunpack.c.h.b16 %v715
      %v760 = vunpack.c.l.b16 %v716
      %v761 = vunpack.c.h.b16 %v716
      %v762 = vunpack.c.l.b16 %v717
      %v763 = vunpack.c.h.b16 %v717
      %v764 = vunpack.c.l.b16 %v718
      %v765 = vunpack.c.h.b16 %v718
      %v766 = vunpack.c.l.b16 %v719
      %v767 = vunpack.c.h.b16 %v719
      %v768 = vpack.c.b16 %v736, %v736
      %v769 = vpack.c.b16 %v737, %v737
      %v770 = vpack.c.b16 %v738, %v738
      %v771 = vpack.c.b16 %v739, %v739
      %v772 = vpack.c.b16 %v740, %v740
      %v773 = vpack.c.b16 %v741, %v741
      %v774 = vpack.c.b16 %v742, %v742
      %v775 = vpack.c.b16 %v743, %v743
      %v776 = vpack.c.b16 %v744, %v744
      %v777 = vpack.c.b16 %v745, %v745
      %v778 = vpack.c.b16 %v746, %v746
      %v779 = vpack.c.b16 %v747, %v747
      %v780 = vpack.c.b16 %v748, %v748
      %v781 = vpack.c.b16 %v749, %v749
      %v782 = vpack.c.b16 %v750, %v750
      %v783 = vpack.c.b16 %v751, %v751
      %v784 = vpack.c.b16 %v752, %v752
      %v785 = vpack.c.b16 %v753, %v753
      %v786 = vpack.c.b16 %v754, %v754
      %v787 = vpack.c.b16 %v755, %v755
      %v788 = vpack.c.b16 %v756, %v756
      %v789 = vpack.c.b16 %v757, %v757
      %v790 = vpack.c.b16 %v758, %v758
      %v791 = vpack.c.b16 %v759, %v759
      %v792 = vpack.c.b16 %v760, %v760
      %v793 = vpack.c.b16 %v761, %v761
      %v794 = vpack.c.b16 %v762, %v762
      %v795 = vpack.c.b16 %v763, %v763
      %v796 = vpack.c.b16 %v764, %v764
      %v797 = vpack.c.b16 %v765, %v765
      %v798 = vpack.c.b16 %v766, %v766
      %v799 = vpack.c.b16 %v767, %v767
      %832 = vst [vmem:[#allocation8] sm:$0xf] %v768
      %833 = vst [vmem:[#allocation8 + $0x4] sm:$0xf] %v769
      %834 = vst [vmem:[#allocation8 + $0x8] sm:$0xf] %v770
      %835 = vst [vmem:[#allocation8 + $0xc] sm:$0xf] %v771
      %836 = vst [vmem:[#allocation8 + $0x10] sm:$0xf] %v772
      %837 = vst [vmem:[#allocation8 + $0x14] sm:$0xf] %v773
      %838 = vst [vmem:[#allocation8 + $0x18] sm:$0xf] %v774
      %839 = vst [vmem:[#allocation8 + $0x1c] sm:$0xf] %v775
      %840 = vst [vmem:[#allocation8 + $0x20] sm:$0xf] %v776
      %841 = vst [vmem:[#allocation8 + $0x24] sm:$0xf] %v777
      %842 = vst [vmem:[#allocation8 + $0x28] sm:$0xf] %v778
      %843 = vst [vmem:[#allocation8 + $0x2c] sm:$0xf] %v779
      %844 = vst [vmem:[#allocation8 + $0x30] sm:$0xf] %v780
      %845 = vst [vmem:[#allocation8 + $0x34] sm:$0xf] %v781
      %846 = vst [vmem:[#allocation8 + $0x38] sm:$0xf] %v782
      %847 = vst [vmem:[#allocation8 + $0x3c] sm:$0xf] %v783
      %848 = vst [vmem:[#allocation8 + $0x40] sm:$0xf] %v784
      %849 = vst [vmem:[#allocation8 + $0x44] sm:$0xf] %v785
      %850 = vst [vmem:[#allocation8 + $0x48] sm:$0xf] %v786
      %851 = vst [vmem:[#allocation8 + $0x4c] sm:$0xf] %v787
      %852 = vst [vmem:[#allocation8 + $0x50] sm:$0xf] %v788
      %853 = vst [vmem:[#allocation8 + $0x54] sm:$0xf] %v789
      %854 = vst [vmem:[#allocation8 + $0x58] sm:$0xf] %v790
      %855 = vst [vmem:[#allocation8 + $0x5c] sm:$0xf] %v791
      %856 = vst [vmem:[#allocation8 + $0x60] sm:$0xf] %v792
      %857 = vst [vmem:[#allocation8 + $0x64] sm:$0xf] %v793
      %858 = vst [vmem:[#allocation8 + $0x68] sm:$0xf] %v794
      %859 = vst [vmem:[#allocation8 + $0x6c] sm:$0xf] %v795
      %860 = vst [vmem:[#allocation8 + $0x70] sm:$0xf] %v796
      %861 = vst [vmem:[#allocation8 + $0x74] sm:$0xf] %v797
      %862 = vst [vmem:[#allocation8 + $0x78] sm:$0xf] %v798
      %863 = vst [vmem:[#allocation8 + $0x7c] sm:$0xf] %v799
    $region29: #{tpu_custom_call.1} parent=1 // pred_fallthru
      _
    // Predicated region
    $region30: #{tpu_custom_call.1} parent=1 // pred_check
      _
    $region31: #{tpu_custom_call.1} parent=1 // pred_check_branch
      %865 = sbr.rel (0) target = $region33
    $region32: #{tpu_custom_call.1} parent=1 // pred_region
      %s867 = ssub.s32 2048, 2048
      %868 = vsyncadd [#allocation5], %s867
      %s869 = sshll.u32 [#allocation8], 4
      %s870 = int_to_ptr.vmem [resolvable:$true] %s869
      %875 = dma.vmem_to_hbm [thread:$0]  %s870, 2048, %s3, [#allocation5], 64, 64, 4
    $region33: #{tpu_custom_call.1} parent=1 // pred_fallthru
      _
    // Predicated region
    $region34: #{tpu_custom_call.1} parent=1 // pred_check
      _
    $region35: #{tpu_custom_call.1} parent=1 // pred_check_branch
      %877 = sbr.rel (0) target = $region37
    $region36: #{tpu_custom_call.1} parent=1 // pred_region
      %878 = dma.done [#allocation5], 2048
    $region37: #{tpu_custom_call.1} parent=1 // pred_fallthru
      _
    %879 = vsyncpa [#allocation4], 1
    %880 = vsyncpa [#allocation7], 1
    %881 = vsyncpa [#allocation5], 1

</llo_original>
